<compile_context>
chip_gen: v7x
topology: tpu7x:2x2x1
jax: 0.10.0
libtpu: 0.0.40
codegen_flags: <defaults>
</compile_context>

<pallas_src>
import jax
import jax.numpy as jnp
import numpy as np
from jax.experimental import pallas as pl
from jax.experimental.pallas import tpu as pltpu


def _dy_nconv_kernel(x_ref, a_ref, o_ref):
    # x_ref: (TB, C, V), a_ref: (TB, V, W), o_ref: (TB, C, W)
    o_ref[...] = jnp.einsum(
        'bcv,bvw->bcw', x_ref[...], a_ref[...],
        preferred_element_type=jnp.float32,
    ).astype(o_ref.dtype)


def _vmem_budget_bytes():
    """Generation-aware per-step VMEM budget for the batch-tile picker."""
    cap = None
    try:
        info = pltpu.get_tpu_info()
        cap = getattr(info, "vmem_capacity_bytes", None)
    except Exception:
        cap = None
    if cap is None:
        return 24 << 20               # conservative: safe on v7x's 64 MiB
    if cap >= (100 << 20):
        return 40 << 20               # v5e / v6e: 128 MiB physical VMEM
    return 24 << 20                   # v7x: 64 MiB physical VMEM


def _largest_divisor_leq(n, cap):
    """Largest divisor of n that is <= cap (>=1). Avoids any jnp.pad."""
    cap = max(1, min(int(cap), int(n)))
    best = 1
    for d in range(1, cap + 1):
        if n % d == 0:
            best = d
    return best


def _pick_batch_tile(nbatch, per_elem_bytes, budget_bytes):
    """Batch tile: fits the VMEM budget, divides B, leaves >= ~8 grid steps."""
    tb_budget = max(1, budget_bytes // max(per_elem_bytes, 1))
    # >= ~8 steps: keeps both v7x TensorCores busy (parallel grid axis) and
    # keeps software pipelining alive; never collapse the grid to one step.
    tb_cap = min(tb_budget, 256, max(1, nbatch // 8))
    return _largest_divisor_leq(nbatch, tb_cap)


def dy_nconv_pallas(x, A, *, tile_b=None, compute_dtype=None):
    """out[n,c,w,l] = sum_v x[n,c,v,l] * A[n,v,w,l]  (== torch dy_nconv).

    compute_dtype: optional narrower dtype (e.g. jnp.bfloat16) folded into the
    operand layout change to halve HBM traffic; accumulation stays f32 and the
    output keeps x.dtype. Default None keeps exact input-dtype semantics.
    """
    N, C, V, L = x.shape
    Na, Va, W, La = A.shape
    assert (Na, Va, La) == (N, V, L), "A must be (N, V, W, L) matching x"
    B = N * L
    out_dtype = x.dtype
    in_dtype = jnp.dtype(compute_dtype) if compute_dtype is not None else jnp.dtype(x.dtype)

    # Layout plumbing only: present each (n,l) pair's matmul operands with the
    # contraction/free dims as the last two (sublane, lane) dims.
    # allow_input_fusion below lets XLA fold these (and the optional cast)
    # into the pallas_call's operand windows rather than materializing copies.
    x3 = jnp.transpose(x, (0, 3, 1, 2)).reshape(B, C, V).astype(in_dtype)
    a3 = jnp.transpose(A, (0, 3, 1, 2)).reshape(B, V, W).astype(in_dtype)

    in_item = in_dtype.itemsize
    out_item = jnp.dtype(out_dtype).itemsize
    # Per batch element: double-buffered input blocks + double-buffered output
    # block + the f32 einsum temporary that exists before the downcast/store.
    per_elem = (2 * in_item * (C * V + V * W)
                + 2 * out_item * (C * W)
                + 4 * (C * W))
    budget = _vmem_budget_bytes()

    if tile_b is None:
        TB = _pick_batch_tile(B, per_elem, budget)
    else:
        TB = _largest_divisor_leq(B, tile_b)   # snap to a divisor of B
    grid_steps = B // TB

    # VMEM limit derived from what this TB actually needs plus headroom for
    # Mosaic internal scratch, clamped to stay well inside physical VMEM.
    per_step = TB * per_elem
    vmem_limit = int(min(max(per_step + (4 << 20), 32 << 20), 2 * budget))

    cost = pl.CostEstimate(
        flops=2 * B * C * V * W,
        transcendentals=0,
        bytes_accessed=B * (in_item * (C * V + V * W) + out_item * C * W),
    )

    # Block last-two dims equal the full array dims -> (8,128) rule satisfied
    # for any C/V/W.
    # TODO(synk): for node counts far from a lane multiple (e.g. W=137/207),
    # zero-padding W to 128/256 would give unmasked lane-dense stores.
    out = pl.pallas_call(
        _dy_nconv_kernel,
        grid=(grid_steps,),
        in_specs=[
            pl.BlockSpec((TB, C, V), lambda i: (i, 0, 0)),
            pl.BlockSpec((TB, V, W), lambda i: (i, 0, 0)),
        ],
        out_specs=pl.BlockSpec((TB, C, W), lambda i: (i, 0, 0)),
        out_shape=jax.ShapeDtypeStruct((B, C, W), out_dtype),
        compiler_params=pltpu.CompilerParams(
            dimension_semantics=("parallel",),   # independent tiles -> megacore OK
            vmem_limit_bytes=vmem_limit,
            allow_input_fusion=[True, True],     # fold operand transposes/casts
        ),
        cost_estimate=cost,
    )(x3, a3)

    # (B, C, W) -> (N, L, C, W) -> (N, C, W, L)  (matches PyTorch 'ncwl')
    out = out.reshape(N, L, C, W)
    return jnp.transpose(out, (0, 2, 3, 1))


def dy_nconv_ref(x, A):
    """Pure-JAX reference mirroring the PyTorch forward exactly."""
    return jnp.einsum('ncvl,nvwl->ncwl', x, A)


if __name__ == "__main__":
    # Small demo shapes consistent with the module: batch=2, channels=4,
    # nodes V=W=16, seq len L=8.
    N, C, V, W, L = 2, 4, 16, 16, 8

    key = jax.random.PRNGKey(0)
    k1, k2 = jax.random.split(key)
    x = jax.random.normal(k1, (N, C, V, L), jnp.float32)
    A = jax.random.normal(k2, (N, V, W, L), jnp.float32)

    # Auto tile pick: B = N*L = 16 -> TB = 2 -> 8 software-pipelined grid
    # steps shared across both TensorCores on v7x.
    y = dy_nconv_pallas(x, A)
    y = jax.block_until_ready(y)

    y_ref = dy_nconv_ref(x, A)
    np.testing.assert_allclose(np.asarray(y), np.asarray(y_ref),
                               rtol=1e-4, atol=1e-4)
    print("KERNEL_OK")
</pallas_src>

<mosaic_0001>
module attributes {stable_mosaic.version = 11 : i64} {
  func.func @_dy_nconv_kernel(%arg0: i32, %arg1: memref<2x4x16xf32, #tpu.memory_space<vmem>>, %arg2: memref<2x16x16xf32, #tpu.memory_space<vmem>>, %arg3: memref<2x4x16xf32, #tpu.memory_space<vmem>>) attributes {dimension_semantics = [#tpu.dimension_semantics<parallel>], iteration_bounds = array<i64: 8>, scalar_prefetch = 0 : i64, scratch_operands = 0 : i64, tpu.core_type = #tpu.core_type<tc>, window_params = [{transform_indices = @transform_0, window_bounds = array<i64: 2, 4, 16>}, {transform_indices = @transform_1, window_bounds = array<i64: 2, 16, 16>}, {transform_indices = @transform_2, window_bounds = array<i64: 2, 4, 16>}]} {
    %c0 = arith.constant 0 : index
    %c0_0 = arith.constant 0 : index
    %c0_1 = arith.constant 0 : index
    %0 = vector.load %arg1[%c0, %c0_0, %c0_1] : memref<2x4x16xf32, #tpu.memory_space<vmem>>, vector<2x4x16xf32>
    %c0_2 = arith.constant 0 : index
    %c0_3 = arith.constant 0 : index
    %c0_4 = arith.constant 0 : index
    %1 = vector.load %arg2[%c0_2, %c0_3, %c0_4] : memref<2x16x16xf32, #tpu.memory_space<vmem>>, vector<2x16x16xf32>
    "tpu.trace_start"() <{level = 10 : i32, message = "bcv,bvw->bcw"}> : () -> ()
    %cst = arith.constant dense<0.000000e+00> : vector<2x4x16xf32>
    %2 = tpu.matmul %0, %1, %cst {dimension_numbers = #tpu.dot_dimension_numbers<[2], [1], [1], [2], [0, 0, 0, 1, 1, 2], [0], [0]>} : vector<2x4x16xf32>, vector<2x16x16xf32>, vector<2x4x16xf32> -> vector<2x4x16xf32>
    "tpu.trace_stop"() : () -> ()
    %c0_5 = arith.constant 0 : index
    %c0_6 = arith.constant 0 : index
    %c0_7 = arith.constant 0 : index
    %3 = vector.load %arg3[%c0_5, %c0_6, %c0_7] : memref<2x4x16xf32, #tpu.memory_space<vmem>>, vector<2x4x16xf32>
    tpu.vector_store %arg3[%c0_5, %c0_6, %c0_7], %2 {strides = array<i32>} : memref<2x4x16xf32, #tpu.memory_space<vmem>>, vector<2x4x16xf32>,
    return
  }
  func.func @transform_0(%arg0: i32) -> (i32, i32, i32) {
    %c0_i32 = arith.constant 0 : i32
    %c0_i32_0 = arith.constant 0 : i32
    %c0_i32_1 = arith.constant 0 : i32
    return %arg0, %c0_i32, %c0_i32_0 : i32, i32, i32
  }
  func.func @transform_1(%arg0: i32) -> (i32, i32, i32) {
    %c0_i32 = arith.constant 0 : i32
    %c0_i32_0 = arith.constant 0 : i32
    %c0_i32_1 = arith.constant 0 : i32
    return %arg0, %c0_i32, %c0_i32_0 : i32, i32, i32
  }
  func.func @transform_2(%arg0: i32) -> (i32, i32, i32) {
    %c0_i32 = arith.constant 0 : i32
    %c0_i32_0 = arith.constant 0 : i32
    %c0_i32_1 = arith.constant 0 : i32
    return %arg0, %c0_i32, %c0_i32_0 : i32, i32, i32
  }
}

</mosaic_0001>

<llo_original>
// kernel: tpu_custom_call.1
$region0: #{tpu_custom_call.1}
  #allocation0 [shape = 'u32[]', space=smem, size = 0x4, offset = 0x4, fixed_abs, tag = 'smem constant byte address 0x4 - core index']
  #allocation1 [shape = 'u32[144,128]{1,0:T(1,128)}', space=vmem, size = 0x12000, scoped, tag = 'internal scratch']
  %s0 = inlined_call_operand.hbm [shape: f32[16,4,16], index: 0, kind: input, shape index: {}]
  %s1 = inlined_call_operand.hbm [shape: f32[16,16,16], index: 1, kind: input, shape index: {}]
  %s2 = inlined_call_operand.hbm [shape: f32[16,4,16], index: 2, kind: output, shape index: {}]
  %s3 = sld [smem:[#allocation0]]
  $region49: #{tpu_custom_call.1} parent=0
    _
  %s5 = ssub.s32 1, %s3
  %s6 = scalar_select 0, %s5, %s3
  $region1: #{tpu_custom_call.1} parent=0
    #allocation2 [shape = 'u8[8192]{0}', space=vmem, size = 0x2000, scoped, tag = 'input window, operand 0']
    #allocation3 [shape = 's32[2]{0}', space=sflag, size = 0x8, scoped, tag = 'scoped memory for tpu_custom_call.1']
    #allocation4 [shape = 's32[2]{0}', space=sflag, size = 0x8, scoped, tag = 'scoped memory for tpu_custom_call.1']
    #allocation5 [shape = 'u8[32768]{0}', space=vmem, size = 0x8000, scoped, tag = 'input window, operand 1']
    #allocation6 [shape = 's32[2]{0}', space=sflag, size = 0x8, scoped, tag = 'scoped memory for tpu_custom_call.1']
    #allocation7 [shape = 'u8[8192]{0}', space=vmem, size = 0x2000, scoped, tag = 'output window, operand 0']
    %7 = vsyncpa [#allocation3], 0
    %s8 = scalar_lea.sflag [#allocation3], 1
    %9 = vsyncpa %s8, 0
    %10 = vsyncpa [#allocation6], 0
    %s11 = scalar_lea.sflag [#allocation6], 1
    %12 = vsyncpa %s11, 0
    %13 = vsyncpa [#allocation4], 0
    %s14 = scalar_lea.sflag [#allocation4], 1
    %15 = vsyncpa %s14, 0
    loop: start=0, step=1, limit=10
    $region2: #{tpu_custom_call.1} parent=1 // loop_pre_header
      _
    $region3: #{tpu_custom_call.1} parent=1 // loop_header
      %s17 = sphi 0, %s21
      %p18 = scmp.ge.s32.totalorder %s17, 10
      %s27 = sphi 0, %s29
      %s30 = sphi 0, %s27
      %s31 = sphi 0, %s30
      %s47 = sphi 0, %s31
      %s53 = sphi 0, %s55
      %s56 = sphi 0, %s53
      %s57 = sphi 0, %s56
      %s73 = sphi 0, %s57
      %s79 = sphi 0, %s81
      %s82 = sphi 0, %s79
      %s83 = sphi 0, %s82
      %s99 = sphi 0, %s83
    $region4: #{tpu_custom_call.1} parent=1 // loop_header_branch
      %20 = sbr.rel (%p18) target = $region8
    $region5: #{tpu_custom_call.1} parent=1 // loop_body
      %s22 = ssub.s32 %s17, 1
      %s23 = ssub.s32 %s17, 2
      %s24 = sadd.s32 %s17, 1
      %s25 = ssub.s32 %s17, %s24
      %p26 = scmp.eq.s32.totalorder %s25, 0
      %s28 = sadd.s32 %s27, 1
      %s29 = scalar_select %p26, %s27, %s28
      %p32 = pneg %p26
      %p33 = scmp.eq.s32.totalorder %s17, 7
      %p34 = por %p32, %p33
      %p35 = scmp.ne.s32.totalorder %s27, %s30
      %p36 = scmp.eq.s32.totalorder %s17, 0
      %p37 = por %p35, %p36
      %p38 = scmp.ne.s32.totalorder %s27, %s30
      %p39 = scmp.eq.s32.totalorder %s22, 7
      %p40 = por %p38, %p39
      %p41 = scmp.ne.s32.totalorder %s30, %s31
      %p42 = scmp.eq.s32.totalorder %s22, 0
      %p43 = por %p41, %p42
      %p44 = scmp.ne.s32.totalorder %s30, %s31
      %p45 = scmp.eq.s32.totalorder %s23, 7
      %p46 = por %p44, %p45
      %p48 = scmp.ne.s32.totalorder %s31, %s47
      %p49 = scmp.eq.s32.totalorder %s23, 0
      %p50 = por %p48, %p49
      %s51 = ssub.s32 %s17, %s24
      %p52 = scmp.eq.s32.totalorder %s51, 0
      %s54 = sadd.s32 %s53, 1
      %s55 = scalar_select %p52, %s53, %s54
      %p58 = pneg %p52
      %p59 = scmp.eq.s32.totalorder %s17, 7
      %p60 = por %p58, %p59
      %p61 = scmp.ne.s32.totalorder %s53, %s56
      %p62 = scmp.eq.s32.totalorder %s17, 0
      %p63 = por %p61, %p62
      %p64 = scmp.ne.s32.totalorder %s53, %s56
      %p65 = scmp.eq.s32.totalorder %s22, 7
      %p66 = por %p64, %p65
      %p67 = scmp.ne.s32.totalorder %s56, %s57
      %p68 = scmp.eq.s32.totalorder %s22, 0
      %p69 = por %p67, %p68
      %p70 = scmp.ne.s32.totalorder %s56, %s57
      %p71 = scmp.eq.s32.totalorder %s23, 7
      %p72 = por %p70, %p71
      %p74 = scmp.ne.s32.totalorder %s57, %s73
      %p75 = scmp.eq.s32.totalorder %s23, 0
      %p76 = por %p74, %p75
      %s77 = ssub.s32 %s17, %s24
      %p78 = scmp.eq.s32.totalorder %s77, 0
      %s80 = sadd.s32 %s79, 1
      %s81 = scalar_select %p78, %s79, %s80
      %p84 = pneg %p78
      %p85 = scmp.eq.s32.totalorder %s17, 7
      %p86 = por %p84, %p85
      %p87 = scmp.ne.s32.totalorder %s79, %s82
      %p88 = scmp.eq.s32.totalorder %s17, 0
      %p89 = por %p87, %p88
      %p90 = scmp.ne.s32.totalorder %s79, %s82
      %p91 = scmp.eq.s32.totalorder %s22, 7
      %p92 = por %p90, %p91
      %p93 = scmp.ne.s32.totalorder %s82, %s83
      %p94 = scmp.eq.s32.totalorder %s22, 0
      %p95 = por %p93, %p94
      %p96 = scmp.ne.s32.totalorder %s82, %s83
      %p97 = scmp.eq.s32.totalorder %s23, 7
      %p98 = por %p96, %p97
      %p100 = scmp.ne.s32.totalorder %s83, %s99
      %p101 = scmp.eq.s32.totalorder %s23, 0
      %p102 = por %p100, %p101
      %p103 = scmp.le.s32.totalorder 1, %s17
      %p104 = scmp.lt.s32.totalorder %s17, 9
      %p105 = pnand %p103, %p104
      %p106 = pneg %p105
      // Predicated region
      $region9: #{tpu_custom_call.1} parent=5 // pred_check
        _
      $region10: #{tpu_custom_call.1} parent=5 // pred_check_branch
        %108 = sbr.rel (%p105) target = $region12
      $region11: #{tpu_custom_call.1} parent=5 // pred_region
        %s109 = ssub.s32 %s17, 1
      $region12: #{tpu_custom_call.1} parent=5 // pred_fallthru
        _
      %p110 = scmp.lt.s32.totalorder %s17, 8
      // Predicated region
      $region13: #{tpu_custom_call.1} parent=5 // pred_check
        %p111 = pneg %p110
      $region14: #{tpu_custom_call.1} parent=5 // pred_check_branch
        %113 = sbr.rel (%p111) target = $region16
      $region15: #{tpu_custom_call.1} parent=5 // pred_region
        // Predicated region
        $region17: #{tpu_custom_call.1} parent=15 // pred_check
          %p114 = pneg %p37
        $region18: #{tpu_custom_call.1} parent=15 // pred_check_branch
          %116 = sbr.rel (%p114) target = $region20
        $region19: #{tpu_custom_call.1} parent=15 // pred_region
          %s117 = sand.u32 %s27, 1
          %s118 = scalar_lea.sflag [#allocation3], %s117
          %s119 = sand.u32 %s27, 1
          %s120 = smul.addr %s119, 8
          %s121 = scalar_lea.vmem [#allocation2], %s120
          %s122 = smul.u32 2, %s17
          %s124 = ssub.s32 128, 128
          %125 = vsyncadd %s118, %s124
          %s126 = smul.addr %s122, 64
          %s127 = scalar_lea.hbm %s0, %s126
          %s128 = sshll.u32 %s121, 4
          %s129 = int_to_ptr.vmem [resolvable:$true] %s128
          %134 = dma.hbm_to_vmem [thread:$0]  %s127, 128, %s129, %s118, 64, 64, 4
        $region20: #{tpu_custom_call.1} parent=15 // pred_fallthru
          _
        // Predicated region
        $region21: #{tpu_custom_call.1} parent=15 // pred_check
          %p135 = pneg %p63
        $region22: #{tpu_custom_call.1} parent=15 // pred_check_branch
          %137 = sbr.rel (%p135) target = $region24
        $region23: #{tpu_custom_call.1} parent=15 // pred_region
          %s138 = sand.u32 %s53, 1
          %s139 = scalar_lea.sflag [#allocation6], %s138
          %s140 = sand.u32 %s53, 1
          %s141 = smul.addr %s140, 32
          %s142 = scalar_lea.vmem [#allocation5], %s141
          %s143 = smul.u32 2, %s17
          %s145 = ssub.s32 512, 512
          %146 = vsyncadd %s139, %s145
          %s147 = smul.addr %s143, 2
          %s148 = smul.addr %s147, 128
          %s149 = scalar_lea.hbm %s1, %s148
          %s150 = sshll.u32 %s142, 4
          %s151 = int_to_ptr.vmem [resolvable:$true] %s150
          %156 = dma.hbm_to_vmem [thread:$0]  %s149, 512, %s151, %s139, 128, 128, 8
        $region24: #{tpu_custom_call.1} parent=15 // pred_fallthru
          _
      $region16: #{tpu_custom_call.1} parent=5 // pred_fallthru
        _
      %p157 = scmp.le.s32.totalorder 1, %s17
      %p158 = scmp.lt.s32.totalorder %s17, 9
      %p159 = pnand %p157, %p158
      %p160 = pneg %p159
      // Predicated region
      $region25: #{tpu_custom_call.1} parent=5 // pred_check
        _
      $region26: #{tpu_custom_call.1} parent=5 // pred_check_branch
        %162 = sbr.rel (%p159) target = $region28
      $region27: #{tpu_custom_call.1} parent=5 // pred_region
        %s163 = ssub.s32 %s17, 1
        %s164 = sand.u32 %s30, 1
        %s165 = scalar_lea.sflag [#allocation3], %s164
        %s166 = sand.u32 %s30, 1
        %s167 = smul.addr %s166, 8
        %s168 = scalar_lea.vmem [#allocation2], %s167
        // Predicated region
        $region29: #{tpu_custom_call.1} parent=27 // pred_check
          %p169 = pneg %p43
        $region30: #{tpu_custom_call.1} parent=27 // pred_check_branch
          %171 = sbr.rel (%p169) target = $region32
        $region31: #{tpu_custom_call.1} parent=27 // pred_region
          %172 = dma.done %s165, 128
        $region32: #{tpu_custom_call.1} parent=27 // pred_fallthru
          _
        %s173 = sand.u32 %s56, 1
        %s174 = scalar_lea.sflag [#allocation6], %s173
        %s175 = sand.u32 %s56, 1
        %s176 = smul.addr %s175, 32
        %s177 = scalar_lea.vmem [#allocation5], %s176
        // Predicated region
        $region33: #{tpu_custom_call.1} parent=27 // pred_check
          %p178 = pneg %p69
        $region34: #{tpu_custom_call.1} parent=27 // pred_check_branch
          %180 = sbr.rel (%p178) target = $region36
        $region35: #{tpu_custom_call.1} parent=27 // pred_region
          %181 = dma.done %s174, 512
        $region36: #{tpu_custom_call.1} parent=27 // pred_fallthru
          _
        %s182 = sand.u32 %s30, 1
        %s183 = scalar_lea.sflag [#allocation3], %s182
        %s184 = sand.u32 %s30, 1
        %s185 = smul.addr %s184, 8
        %s186 = scalar_lea.vmem [#allocation2], %s185
        %p187 = pneg %p43
        %p188 = pneg %p40
        %s189 = sand.u32 %s56, 1
        %s190 = scalar_lea.sflag [#allocation6], %s189
        %s191 = sand.u32 %s56, 1
        %s192 = smul.addr %s191, 32
        %s193 = scalar_lea.vmem [#allocation5], %s192
        %p194 = pneg %p69
        %p195 = pneg %p66
        %p196 = pneg %p95
        %p197 = pneg %p92
        %s198 = sand.u32 %s82, 1
        %s199 = scalar_lea.sflag [#allocation4], %s198
        %s200 = sand.u32 %s82, 1
        %s201 = smul.addr %s200, 8
        %s202 = scalar_lea.vmem [#allocation7], %s201
        %s203 = smul.u32 2, %s22
        %s204 = smul.u32 2, %s22
        %s205 = smul.u32 2, %s22
        %v206 = vld [vmem:[%s168] sm:$0xf]
        %v207 = vld [vmem:[%s168 + $0x4] sm:$0xf]
        %v208 = vld [vmem:[%s177] sm:$0xff]
        %v209 = vld [vmem:[%s177 + $0x8] sm:$0xff]
        %v210 = vld [vmem:[%s177 + $0x10] sm:$0xff]
        %v211 = vld [vmem:[%s177 + $0x18] sm:$0xff]
        %vm212 = vcmask 130048
        %v214 = vsel %vm212, %v206, 0
        %216 = vmatprep.subr.mxu0 0.0
        %217 = vmatpush1.msra.mxu0 %v208
        %218 = vmatprep.subr.mxu0 0.0
        %219 = vmatpush1.msra.mxu0 %v209
        %220 = vmatprep.subr.mxu0 0.0
        %221 = vmatpush1.msra.mxu0 0.0
        %222 = vmatprep.subr.mxu0 0.0
        %223 = vmatpush1.msra.mxu0 0.0
        %224 = vmatprep.subr.mxu0 0.0
        %225 = vmatpush1.msra.mxu0 0.0
        %226 = vmatprep.subr.mxu0 0.0
        %227 = vmatpush1.msra.mxu0 0.0
        %228 = vmatprep.subr.mxu0 0.0
        %229 = vmatpush1.msra.mxu0 0.0
        %230 = vmatprep.subr.mxu0 0.0
        %231 = vmatpush1.msra.mxu0 0.0
        %232 = vmatprep.subr.mxu0 0.0
        %233 = vmatpush1.msra.mxu0 0.0
        %234 = vmatprep.subr.mxu0 0.0
        %235 = vmatpush1.msra.mxu0 0.0
        %236 = vmatprep.subr.mxu0 0.0
        %237 = vmatpush1.msra.mxu0 0.0
        %238 = vmatprep.subr.mxu0 0.0
        %239 = vmatpush1.msra.mxu0 0.0
        %240 = vmatprep.subr.mxu0 0.0
        %241 = vmatpush1.msra.mxu0 0.0
        %242 = vmatprep.subr.mxu0 0.0
        %243 = vmatpush1.msra.mxu0 0.0
        %244 = vmatprep.subr.mxu0 0.0
        %245 = vmatpush1.msra.mxu0 0.0
        %246 = vmatprep.subr.mxu0 0.0
        %247 = vmatpush1.msra.mxu0 0.0
        %248 = vmatprep.subr.mxu0 0.0
        %249 = vmatpush1.msra.mxu0 0.0
        %250 = vmatprep.subr.mxu0 0.0
        %251 = vmatpush1.msra.mxu0 0.0
        %252 = vmatprep.subr.mxu0 0.0
        %253 = vmatpush1.msra.mxu0 0.0
        %254 = vmatprep.subr.mxu0 0.0
        %255 = vmatpush1.msra.mxu0 0.0
        %256 = vmatprep.subr.mxu0 0.0
        %257 = vmatpush1.msra.mxu0 0.0
        %258 = vmatprep.subr.mxu0 0.0
        %259 = vmatpush1.msra.mxu0 0.0
        %260 = vmatprep.subr.mxu0 0.0
        %261 = vmatpush1.msra.mxu0 0.0
        %262 = vmatprep.subr.mxu0 0.0
        %263 = vmatpush1.msra.mxu0 0.0
        %264 = vmatprep.subr.mxu0 0.0
        %265 = vmatpush1.msra.mxu0 0.0
        %266 = vmatprep.subr.mxu0 0.0
        %267 = vmatpush1.msra.mxu0 0.0
        %268 = vmatprep.subr.mxu0 0.0
        %269 = vmatpush1.msra.mxu0 0.0
        %270 = vmatprep.subr.mxu0 0.0
        %271 = vmatpush1.msra.mxu0 0.0
        %272 = vmatprep.subr.mxu0 0.0
        %273 = vmatpush1.msra.mxu0 0.0
        %274 = vmatprep.subr.mxu0 0.0
        %275 = vmatpush1.msra.mxu0 0.0
        %276 = vmatprep.subr.mxu0 0.0
        %277 = vmatpush1.msra.mxu0 0.0
        %278 = vmatprep.subr.mxu0 0.0
        %279 = vmatpush1.msra.mxu0 0.0
        %280 = vmatprep.mubr.f32.mxu0 0.0
        %281 = vmatmul.mubr.f32.gmra.mrb[0].mxu0 %v214
        %v282 = vpop.f32.mrb[0].mxu0
        %v283 = vadd.f32 0.0, %v282
        %v284 = vpop.f32.mrb[0].mxu0
        %285 = vdwg.mxu0
        %v287 = vsel %vm212, %v207, 0
        %289 = vmatprep.subr.mxu0 0.0
        %290 = vmatpush1.msra.mxu0 %v210
        %291 = vmatprep.subr.mxu0 0.0
        %292 = vmatpush1.msra.mxu0 %v211
        %293 = vmatprep.subr.mxu0 0.0
        %294 = vmatpush1.msra.mxu0 0.0
        %295 = vmatprep.subr.mxu0 0.0
        %296 = vmatpush1.msra.mxu0 0.0
        %297 = vmatprep.subr.mxu0 0.0
        %298 = vmatpush1.msra.mxu0 0.0
        %299 = vmatprep.subr.mxu0 0.0
        %300 = vmatpush1.msra.mxu0 0.0
        %301 = vmatprep.subr.mxu0 0.0
        %302 = vmatpush1.msra.mxu0 0.0
        %303 = vmatprep.subr.mxu0 0.0
        %304 = vmatpush1.msra.mxu0 0.0
        %305 = vmatprep.subr.mxu0 0.0
        %306 = vmatpush1.msra.mxu0 0.0
        %307 = vmatprep.subr.mxu0 0.0
        %308 = vmatpush1.msra.mxu0 0.0
        %309 = vmatprep.subr.mxu0 0.0
        %310 = vmatpush1.msra.mxu0 0.0
        %311 = vmatprep.subr.mxu0 0.0
        %312 = vmatpush1.msra.mxu0 0.0
        %313 = vmatprep.subr.mxu0 0.0
        %314 = vmatpush1.msra.mxu0 0.0
        %315 = vmatprep.subr.mxu0 0.0
        %316 = vmatpush1.msra.mxu0 0.0
        %317 = vmatprep.subr.mxu0 0.0
        %318 = vmatpush1.msra.mxu0 0.0
        %319 = vmatprep.subr.mxu0 0.0
        %320 = vmatpush1.msra.mxu0 0.0
        %321 = vmatprep.subr.mxu0 0.0
        %322 = vmatpush1.msra.mxu0 0.0
        %323 = vmatprep.subr.mxu0 0.0
        %324 = vmatpush1.msra.mxu0 0.0
        %325 = vmatprep.subr.mxu0 0.0
        %326 = vmatpush1.msra.mxu0 0.0
        %327 = vmatprep.subr.mxu0 0.0
        %328 = vmatpush1.msra.mxu0 0.0
        %329 = vmatprep.subr.mxu0 0.0
        %330 = vmatpush1.msra.mxu0 0.0
        %331 = vmatprep.subr.mxu0 0.0
        %332 = vmatpush1.msra.mxu0 0.0
        %333 = vmatprep.subr.mxu0 0.0
        %334 = vmatpush1.msra.mxu0 0.0
        %335 = vmatprep.subr.mxu0 0.0
        %336 = vmatpush1.msra.mxu0 0.0
        %337 = vmatprep.subr.mxu0 0.0
        %338 = vmatpush1.msra.mxu0 0.0
        %339 = vmatprep.subr.mxu0 0.0
        %340 = vmatpush1.msra.mxu0 0.0
        %341 = vmatprep.subr.mxu0 0.0
        %342 = vmatpush1.msra.mxu0 0.0
        %343 = vmatprep.subr.mxu0 0.0
        %344 = vmatpush1.msra.mxu0 0.0
        %345 = vmatprep.subr.mxu0 0.0
        %346 = vmatpush1.msra.mxu0 0.0
        %347 = vmatprep.subr.mxu0 0.0
        %348 = vmatpush1.msra.mxu0 0.0
        %349 = vmatprep.subr.mxu0 0.0
        %350 = vmatpush1.msra.mxu0 0.0
        %351 = vmatprep.subr.mxu0 0.0
        %352 = vmatpush1.msra.mxu0 0.0
        %353 = vmatprep.mubr.f32.mxu0 0.0
        %354 = vmatmul.mubr.f32.gmra.mrb[0].mxu0 %v287
        %v355 = vpop.f32.mrb[0].mxu0
        %v356 = vadd.f32 0.0, %v355
        %v357 = vpop.f32.mrb[0].mxu0
        %358 = vdwg.mxu0
        %vm359 = vcmask 125952
        %360 = vst.msk [vmem:[%s202] sm:$0xf] %vm359, %v283
        %361 = vst.msk [vmem:[%s202 + $0x4] sm:$0xf] %vm359, %v356
        %s362 = sand.u32 %s82, 1
        %s363 = scalar_lea.sflag [#allocation4], %s362
        %s364 = sand.u32 %s82, 1
        %s365 = smul.addr %s364, 8
        %s366 = scalar_lea.vmem [#allocation7], %s365
        // Predicated region
        $region37: #{tpu_custom_call.1} parent=27 // pred_check
          %p367 = pneg %p92
        $region38: #{tpu_custom_call.1} parent=27 // pred_check_branch
          %369 = sbr.rel (%p367) target = $region40
        $region39: #{tpu_custom_call.1} parent=27 // pred_region
          %s370 = smul.u32 2, %s22
          %s372 = ssub.s32 128, 128
          %373 = vsyncadd %s363, %s372
          %s374 = smul.addr %s370, 64
          %s375 = scalar_lea.hbm %s2, %s374
          %s376 = sshll.u32 %s366, 4
          %s377 = int_to_ptr.vmem [resolvable:$true] %s376
          %382 = dma.vmem_to_hbm [thread:$0]  %s377, 128, %s375, %s363, 64, 64, 4
        $region40: #{tpu_custom_call.1} parent=27 // pred_fallthru
          _
      $region28: #{tpu_custom_call.1} parent=5 // pred_fallthru
        _
      %p383 = scmp.le.s32.totalorder 2, %s17
      // Predicated region
      $region41: #{tpu_custom_call.1} parent=5 // pred_check
        %p384 = pneg %p383
      $region42: #{tpu_custom_call.1} parent=5 // pred_check_branch
        %386 = sbr.rel (%p384) target = $region44
      $region43: #{tpu_custom_call.1} parent=5 // pred_region
        %s387 = ssub.s32 %s17, 2
        // Predicated region
        $region45: #{tpu_custom_call.1} parent=43 // pred_check
          %p388 = pneg %p98
        $region46: #{tpu_custom_call.1} parent=43 // pred_check_branch
          %390 = sbr.rel (%p388) target = $region48
        $region47: #{tpu_custom_call.1} parent=43 // pred_region
          %s391 = sand.u32 %s83, 1
          %s392 = scalar_lea.sflag [#allocation4], %s391
          %s393 = sand.u32 %s83, 1
          %s394 = smul.addr %s393, 8
          %s395 = scalar_lea.vmem [#allocation7], %s394
          %396 = dma.done %s392, 128
        $region48: #{tpu_custom_call.1} parent=43 // pred_fallthru
          _
      $region44: #{tpu_custom_call.1} parent=5 // pred_fallthru
        _
    $region6: #{tpu_custom_call.1} parent=1 // loop_footer
      %s21 = sadd.s32 1, %s17
    $region7: #{tpu_custom_call.1} parent=1 // loop_footer_branch
      %16 = sbr.rel target = $region3
    $region8: #{tpu_custom_call.1} parent=1 // loop_exit
      _
    %397 = vsyncpa [#allocation3], 1
    %s398 = scalar_lea.sflag [#allocation3], 1
    %399 = vsyncpa %s398, 1
    %400 = vsyncpa [#allocation6], 1
    %s401 = scalar_lea.sflag [#allocation6], 1
    %402 = vsyncpa %s401, 1
    %403 = vsyncpa [#allocation4], 1
    %s404 = scalar_lea.sflag [#allocation4], 1
    %405 = vsyncpa %s404, 1

</llo_original>
